<compile_context>
chip_gen: v5e
topology: v5e:2x2
jax: 0.10.0
libtpu: 0.0.40
codegen_flags: <defaults>
</compile_context>

<pallas_src>
import functools

import jax
import jax.numpy as jnp
from jax.experimental import pallas as pl
from jax.experimental.pallas import tpu as pltpu

HIDDEN = 32
IN_PAD = 8     # 6 -> 8 : sublane-friendly row stride for the x stream
OUT_PAD = 128  # 2 -> 128 : lane-dense output stores


def dqn_mlp_kernel(x_ref, w1_ref, b1_ref, w2_ref, b2_ref, w3_ref, b3_ref, o_ref):
    # x_ref : (TM, IN_PAD)       bf16
    # w1_ref: (IN_PAD, HIDDEN)   bf16   b1_ref: (1, HIDDEN)   f32
    # w2_ref: (HIDDEN, HIDDEN)   bf16   b2_ref: (1, HIDDEN)   f32
    # w3_ref: (HIDDEN, OUT_PAD)  bf16   b3_ref: (1, OUT_PAD)  f32
    # o_ref : (TM, OUT_PAD)      f32
    x = x_ref[...]

    h1 = jnp.dot(x, w1_ref[...], preferred_element_type=jnp.float32) + b1_ref[...]
    h1 = jnp.maximum(h1, 0.0).astype(jnp.bfloat16)

    h2 = jnp.dot(h1, w2_ref[...], preferred_element_type=jnp.float32) + b2_ref[...]
    h2 = jnp.maximum(h2, 0.0).astype(jnp.bfloat16)

    q = jnp.dot(h2, w3_ref[...], preferred_element_type=jnp.float32) + b3_ref[...]
    o_ref[...] = q


def prepare_params(params):
    """Cast / zero-pad weights once so the kernel sees aligned, lane-dense operands."""
    num_inputs = params["w1"].shape[0]
    num_actions = params["w3"].shape[1]

    w1p = jnp.zeros((IN_PAD, HIDDEN), jnp.bfloat16)
    w1p = w1p.at[:num_inputs, :].set(params["w1"].astype(jnp.bfloat16))

    w3p = jnp.zeros((HIDDEN, OUT_PAD), jnp.bfloat16)
    w3p = w3p.at[:, :num_actions].set(params["w3"].astype(jnp.bfloat16))

    b3p = jnp.zeros((1, OUT_PAD), jnp.float32)
    b3p = b3p.at[:, :num_actions].set(params["b3"].astype(jnp.float32))

    return {
        "w1": w1p,
        "b1": params["b1"].astype(jnp.float32),
        "w2": params["w2"].astype(jnp.bfloat16),
        "b2": params["b2"].astype(jnp.float32),
        "w3": w3p,
        "b3": b3p,
    }


@functools.partial(jax.jit, static_argnames=("num_actions", "tm"))
def dqn_forward(x, pparams, *, num_actions, tm=256):
    """x: (B, num_inputs) f32. pparams: output of prepare_params.

    Returns (B, num_actions) f32 Q-values.
    """
    B, num_inputs = x.shape

    # Pad the batch up to a multiple of tm; padded rows are zero and sliced off.
    b_pad = max(pl.cdiv(B, tm), 1) * tm
    grid_b = b_pad // tm

    xp = jnp.zeros((b_pad, IN_PAD), jnp.bfloat16)
    xp = xp.at[:B, :num_inputs].set(x.astype(jnp.bfloat16))

    q_pad = pl.pallas_call(
        dqn_mlp_kernel,
        out_shape=jax.ShapeDtypeStruct((b_pad, OUT_PAD), jnp.float32),
        grid=(grid_b,),
        in_specs=[
            pl.BlockSpec((tm, IN_PAD), lambda i: (i, 0)),       # x: one batch tile per step
            pl.BlockSpec((IN_PAD, HIDDEN), lambda i: (0, 0)),   # weights/biases: resident
            pl.BlockSpec((1, HIDDEN), lambda i: (0, 0)),
            pl.BlockSpec((HIDDEN, HIDDEN), lambda i: (0, 0)),
            pl.BlockSpec((1, HIDDEN), lambda i: (0, 0)),
            pl.BlockSpec((HIDDEN, OUT_PAD), lambda i: (0, 0)),
            pl.BlockSpec((1, OUT_PAD), lambda i: (0, 0)),
        ],
        out_specs=pl.BlockSpec((tm, OUT_PAD), lambda i: (i, 0)),
        compiler_params=pltpu.CompilerParams(
            dimension_semantics=("parallel",),  # shard batch tiles across v7x's 2 TCs
        ),
    )(xp, pparams["w1"], pparams["b1"], pparams["w2"], pparams["b2"],
      pparams["w3"], pparams["b3"])

    return q_pad[:B, :num_actions]


def init_dqn_params(key, num_inputs, num_actions, hidden=HIDDEN):
    """Deterministic init mirroring PyTorch's default Linear init (uniform +/- 1/sqrt(fan_in))."""
    ks = jax.random.split(key, 6)

    def linear(kw, kb, fan_in, fan_out):
        bound = 1.0 / jnp.sqrt(jnp.float32(fan_in))
        w = jax.random.uniform(kw, (fan_in, fan_out), jnp.float32, -bound, bound)
        b = jax.random.uniform(kb, (1, fan_out), jnp.float32, -bound, bound)
        return w, b

    w1, b1 = linear(ks[0], ks[1], num_inputs, hidden)
    w2, b2 = linear(ks[2], ks[3], hidden, hidden)
    w3, b3 = linear(ks[4], ks[5], hidden, num_actions)
    return {"w1": w1, "b1": b1, "w2": w2, "b2": b2, "w3": w3, "b3": b3}


def dqn_reference(x, params):
    """Plain-JAX reference using the same bf16-operand / f32-accumulate scheme."""
    xb = x.astype(jnp.bfloat16)
    w1 = params["w1"].astype(jnp.bfloat16)
    w2 = params["w2"].astype(jnp.bfloat16)
    w3 = params["w3"].astype(jnp.bfloat16)
    h1 = jnp.maximum(
        jnp.dot(xb, w1, preferred_element_type=jnp.float32) + params["b1"], 0.0
    ).astype(jnp.bfloat16)
    h2 = jnp.maximum(
        jnp.dot(h1, w2, preferred_element_type=jnp.float32) + params["b2"], 0.0
    ).astype(jnp.bfloat16)
    return jnp.dot(h2, w3, preferred_element_type=jnp.float32) + params["b3"]


if __name__ == "__main__":
    key = jax.random.PRNGKey(0)
    k_params, k_x, k_x2 = jax.random.split(key, 3)

    num_inputs = 6    # len(state) in the reference script
    num_actions = 2   # random.randrange(2) in act()
    batch = 1024      # replay-batch style forward -> 4 grid tiles of 256 rows

    params = init_dqn_params(k_params, num_inputs, num_actions)
    pparams = prepare_params(params)

    # Batched replay-buffer forward through the Pallas kernel.
    x = jax.random.normal(k_x, (batch, num_inputs), dtype=jnp.float32)
    q = dqn_forward(x, pparams, num_actions=num_actions)
    jax.block_until_ready(q)
    assert q.shape == (batch, num_actions)

    q_ref = dqn_reference(x, params)
    assert jnp.allclose(q, q_ref, atol=1e-2, rtol=1e-2), float(jnp.max(jnp.abs(q - q_ref)))

    # Small-batch call exercises the batch-padding path (pads 2 -> 256 rows).
    x2 = jax.random.normal(k_x2, (2, num_inputs), dtype=jnp.float32)
    q2 = dqn_forward(x2, pparams, num_actions=num_actions)
    jax.block_until_ready(q2)
    assert q2.shape == (2, num_actions)
    assert jnp.allclose(q2, dqn_reference(x2, params), atol=1e-2, rtol=1e-2)

    print("KERNEL_OK")
</pallas_src>

<mosaic_0001>
module attributes {stable_mosaic.version = 11 : i64} {
  func.func @dqn_mlp_kernel(%arg0: i32, %arg1: memref<256x8xbf16, #tpu.memory_space<vmem>>, %arg2: memref<8x32xbf16, #tpu.memory_space<vmem>>, %arg3: memref<1x32xf32, #tpu.memory_space<vmem>>, %arg4: memref<32x32xbf16, #tpu.memory_space<vmem>>, %arg5: memref<1x32xf32, #tpu.memory_space<vmem>>, %arg6: memref<32x128xbf16, #tpu.memory_space<vmem>>, %arg7: memref<1x128xf32, #tpu.memory_space<vmem>>, %arg8: memref<256x128xf32, #tpu.memory_space<vmem>>) attributes {dimension_semantics = [#tpu.dimension_semantics<parallel>], iteration_bounds = array<i64: 4>, scalar_prefetch = 0 : i64, scratch_operands = 0 : i64, tpu.core_type = #tpu.core_type<tc>, window_params = [{transform_indices = @transform_0, window_bounds = array<i64: 256, 8>}, {pipeline_mode = #tpu.pipeline_mode<synchronous>, transform_indices = @transform_1, window_bounds = array<i64: 8, 32>}, {pipeline_mode = #tpu.pipeline_mode<synchronous>, transform_indices = @transform_2, window_bounds = array<i64: 1, 32>}, {pipeline_mode = #tpu.pipeline_mode<synchronous>, transform_indices = @transform_3, window_bounds = array<i64: 32, 32>}, {pipeline_mode = #tpu.pipeline_mode<synchronous>, transform_indices = @transform_4, window_bounds = array<i64: 1, 32>}, {pipeline_mode = #tpu.pipeline_mode<synchronous>, transform_indices = @transform_5, window_bounds = array<i64: 32, 128>}, {pipeline_mode = #tpu.pipeline_mode<synchronous>, transform_indices = @transform_6, window_bounds = array<i64: 1, 128>}, {transform_indices = @transform_7, window_bounds = array<i64: 256, 128>}]} {
    %c0 = arith.constant 0 : index
    %c0_0 = arith.constant 0 : index
    %0 = vector.load %arg1[%c0, %c0_0] : memref<256x8xbf16, #tpu.memory_space<vmem>>, vector<256x8xbf16>
    %c0_1 = arith.constant 0 : index
    %c0_2 = arith.constant 0 : index
    %1 = vector.load %arg2[%c0_1, %c0_2] : memref<8x32xbf16, #tpu.memory_space<vmem>>, vector<8x32xbf16>
    %cst = arith.constant dense<0.000000e+00> : vector<256x32xf32>
    %2 = tpu.matmul %0, %1, %cst {dimension_numbers = #tpu.dot_dimension_numbers<[1], [0], [0], [1], [0, 0, 1, 1], [], []>} : vector<256x8xbf16>, vector<8x32xbf16>, vector<256x32xf32> -> vector<256x32xf32>
    %c0_3 = arith.constant 0 : index
    %c0_4 = arith.constant 0 : index
    %3 = vector.load %arg3[%c0_3, %c0_4] : memref<1x32xf32, #tpu.memory_space<vmem>>, vector<1x32xf32>
    %4 = vector.broadcast %3 : vector<1x32xf32> to vector<256x32xf32>
    %5 = arith.addf %2, %4 : vector<256x32xf32>
    %cst_5 = arith.constant 0.000000e+00 : f32
    %6 = vector.broadcast %cst_5 : f32 to vector<256x32xf32>
    %7 = arith.maximumf %5, %6 : vector<256x32xf32>
    %8 = arith.truncf %7 : vector<256x32xf32> to vector<256x32xbf16>
    %c0_6 = arith.constant 0 : index
    %c0_7 = arith.constant 0 : index
    %9 = vector.load %arg4[%c0_6, %c0_7] : memref<32x32xbf16, #tpu.memory_space<vmem>>, vector<32x32xbf16>
    %cst_8 = arith.constant dense<0.000000e+00> : vector<256x32xf32>
    %10 = tpu.matmul %8, %9, %cst_8 {dimension_numbers = #tpu.dot_dimension_numbers<[1], [0], [0], [1], [0, 0, 1, 1], [], []>} : vector<256x32xbf16>, vector<32x32xbf16>, vector<256x32xf32> -> vector<256x32xf32>
    %c0_9 = arith.constant 0 : index
    %c0_10 = arith.constant 0 : index
    %11 = vector.load %arg5[%c0_9, %c0_10] : memref<1x32xf32, #tpu.memory_space<vmem>>, vector<1x32xf32>
    %12 = vector.broadcast %11 : vector<1x32xf32> to vector<256x32xf32>
    %13 = arith.addf %10, %12 : vector<256x32xf32>
    %cst_11 = arith.constant 0.000000e+00 : f32
    %14 = vector.broadcast %cst_11 : f32 to vector<256x32xf32>
    %15 = arith.maximumf %13, %14 : vector<256x32xf32>
    %16 = arith.truncf %15 : vector<256x32xf32> to vector<256x32xbf16>
    %c0_12 = arith.constant 0 : index
    %c0_13 = arith.constant 0 : index
    %17 = vector.load %arg6[%c0_12, %c0_13] : memref<32x128xbf16, #tpu.memory_space<vmem>>, vector<32x128xbf16>
    %cst_14 = arith.constant dense<0.000000e+00> : vector<256x128xf32>
    %18 = tpu.matmul %16, %17, %cst_14 {dimension_numbers = #tpu.dot_dimension_numbers<[1], [0], [0], [1], [0, 0, 1, 1], [], []>} : vector<256x32xbf16>, vector<32x128xbf16>, vector<256x128xf32> -> vector<256x128xf32>
    %c0_15 = arith.constant 0 : index
    %c0_16 = arith.constant 0 : index
    %19 = vector.load %arg7[%c0_15, %c0_16] : memref<1x128xf32, #tpu.memory_space<vmem>>, vector<1x128xf32>
    %20 = vector.broadcast %19 : vector<1x128xf32> to vector<256x128xf32>
    %21 = arith.addf %18, %20 : vector<256x128xf32>
    %c0_17 = arith.constant 0 : index
    %c0_18 = arith.constant 0 : index
    %22 = vector.load %arg8[%c0_17, %c0_18] : memref<256x128xf32, #tpu.memory_space<vmem>>, vector<256x128xf32>
    tpu.vector_store %arg8[%c0_17, %c0_18], %21 {strides = array<i32>} : memref<256x128xf32, #tpu.memory_space<vmem>>, vector<256x128xf32>,
    return
  }
  func.func @transform_0(%arg0: i32) -> (i32, i32) {
    %c0_i32 = arith.constant 0 : i32
    %c0_i32_0 = arith.constant 0 : i32
    return %arg0, %c0_i32 : i32, i32
  }
  func.func @transform_1(%arg0: i32) -> (i32, i32) {
    %c0_i32 = arith.constant 0 : i32
    %c0_i32_0 = arith.constant 0 : i32
    %c0_i32_1 = arith.constant 0 : i32
    return %c0_i32, %c0_i32_0 : i32, i32
  }
  func.func @transform_2(%arg0: i32) -> (i32, i32) {
    %c0_i32 = arith.constant 0 : i32
    %c0_i32_0 = arith.constant 0 : i32
    %c0_i32_1 = arith.constant 0 : i32
    return %c0_i32, %c0_i32_0 : i32, i32
  }
  func.func @transform_3(%arg0: i32) -> (i32, i32) {
    %c0_i32 = arith.constant 0 : i32
    %c0_i32_0 = arith.constant 0 : i32
    %c0_i32_1 = arith.constant 0 : i32
    return %c0_i32, %c0_i32_0 : i32, i32
  }
  func.func @transform_4(%arg0: i32) -> (i32, i32) {
    %c0_i32 = arith.constant 0 : i32
    %c0_i32_0 = arith.constant 0 : i32
    %c0_i32_1 = arith.constant 0 : i32
    return %c0_i32, %c0_i32_0 : i32, i32
  }
  func.func @transform_5(%arg0: i32) -> (i32, i32) {
    %c0_i32 = arith.constant 0 : i32
    %c0_i32_0 = arith.constant 0 : i32
    %c0_i32_1 = arith.constant 0 : i32
    return %c0_i32, %c0_i32_0 : i32, i32
  }
  func.func @transform_6(%arg0: i32) -> (i32, i32) {
    %c0_i32 = arith.constant 0 : i32
    %c0_i32_0 = arith.constant 0 : i32
    %c0_i32_1 = arith.constant 0 : i32
    return %c0_i32, %c0_i32_0 : i32, i32
  }
  func.func @transform_7(%arg0: i32) -> (i32, i32) {
    %c0_i32 = arith.constant 0 : i32
    %c0_i32_0 = arith.constant 0 : i32
    return %arg0, %c0_i32 : i32, i32
  }
}

</mosaic_0001>

<llo_original>
// kernel: dqn_forward.1
$region0: #{dqn_forward.1}
  #allocation0 [shape = 'u32[]', space=smem, size = 0x4, offset = 0x4, fixed_abs, tag = 'smem constant byte address 0x4 - core index']
  #allocation1 [shape = 'u32[72,128]{1,0:T(1,128)}', space=vmem, size = 0x9000, scoped, tag = 'internal scratch']
  %s0 = inlined_call_operand.vmem [shape: bf16[1024,8], index: 0, kind: input, shape index: {}]
  %s1 = inlined_call_operand.vmem [shape: bf16[8,32], index: 1, kind: input, shape index: {}]
  %s2 = inlined_call_operand.vmem [shape: f32[1,32], index: 2, kind: input, shape index: {}]
  %s3 = inlined_call_operand.vmem [shape: bf16[32,32], index: 3, kind: input, shape index: {}]
  %s4 = inlined_call_operand.vmem [shape: f32[1,32], index: 4, kind: input, shape index: {}]
  %s5 = inlined_call_operand.vmem [shape: bf16[32,128], index: 5, kind: input, shape index: {}]
  %s6 = inlined_call_operand.vmem [shape: f32[1,128], index: 6, kind: input, shape index: {}]
  %s7 = inlined_call_operand.vmem [shape: f32[1024,128], index: 7, kind: output, shape index: {}]
  %s8 = sld [smem:[#allocation0]]
  $region61: #{dqn_forward.1} parent=0
    _
  %s10 = ssub.s32 1, %s8
  %s11 = scalar_select 0, %s10, %s8
  loop: start=0, step=1, limit=6
  $region2: #{dqn_forward.1} parent=0 // loop_pre_header
    _
  $region3: #{dqn_forward.1} parent=0 // loop_header
    %s13 = sphi 0, %s17
    %p14 = scmp.ge.s32.totalorder %s13, 6
    %s23 = sphi 0, %s25
    %s26 = sphi 0, %s23
    %s27 = sphi 0, %s26
    %s43 = sphi 0, %s27
    %s47 = sphi 0, %s47
    %s49 = sphi 0, %s47
    %s50 = sphi 0, %s49
    %s64 = sphi 0, %s50
    %s68 = sphi 0, %s68
    %s70 = sphi 0, %s68
    %s71 = sphi 0, %s70
    %s85 = sphi 0, %s71
    %s89 = sphi 0, %s89
    %s91 = sphi 0, %s89
    %s92 = sphi 0, %s91
    %s106 = sphi 0, %s92
    %s110 = sphi 0, %s110
    %s112 = sphi 0, %s110
    %s113 = sphi 0, %s112
    %s127 = sphi 0, %s113
    %s131 = sphi 0, %s131
    %s133 = sphi 0, %s131
    %s134 = sphi 0, %s133
    %s148 = sphi 0, %s134
    %s152 = sphi 0, %s152
    %s154 = sphi 0, %s152
    %s155 = sphi 0, %s154
    %s169 = sphi 0, %s155
    %s175 = sphi 0, %s177
    %s178 = sphi 0, %s175
    %s179 = sphi 0, %s178
    %s195 = sphi 0, %s179
  $region4: #{dqn_forward.1} parent=0 // loop_header_branch
    %16 = sbr.rel (%p14) target = $region8
  $region5: #{dqn_forward.1} parent=0 // loop_body
    %s18 = ssub.s32 %s13, 1
    %s19 = ssub.s32 %s13, 2
    %s20 = sadd.s32 %s13, 1
    %s21 = ssub.s32 %s13, %s20
    %p22 = scmp.eq.s32.totalorder %s21, 0
    %s24 = sadd.s32 %s23, 1
    %s25 = scalar_select %p22, %s23, %s24
    %p28 = pneg %p22
    %p29 = scmp.eq.s32.totalorder %s13, 3
    %p30 = por %p28, %p29
    %p31 = scmp.ne.s32.totalorder %s23, %s26
    %p32 = scmp.eq.s32.totalorder %s13, 0
    %p33 = por %p31, %p32
    %p34 = scmp.ne.s32.totalorder %s23, %s26
    %p35 = scmp.eq.s32.totalorder %s18, 3
    %p36 = por %p34, %p35
    %p37 = scmp.ne.s32.totalorder %s26, %s27
    %p38 = scmp.eq.s32.totalorder %s18, 0
    %p39 = por %p37, %p38
    %p40 = scmp.ne.s32.totalorder %s26, %s27
    %p41 = scmp.eq.s32.totalorder %s19, 3
    %p42 = por %p40, %p41
    %p44 = scmp.ne.s32.totalorder %s27, %s43
    %p45 = scmp.eq.s32.totalorder %s19, 0
    %p46 = por %p44, %p45
    %s48 = sadd.s32 %s47, 1
    %p51 = scmp.eq.s32.totalorder %s13, 3
    %p52 = scmp.ne.s32.totalorder %s47, %s49
    %p53 = scmp.eq.s32.totalorder %s13, 0
    %p54 = por %p52, %p53
    %p55 = scmp.ne.s32.totalorder %s47, %s49
    %p56 = scmp.eq.s32.totalorder %s18, 3
    %p57 = por %p55, %p56
    %p58 = scmp.ne.s32.totalorder %s49, %s50
    %p59 = scmp.eq.s32.totalorder %s18, 0
    %p60 = por %p58, %p59
    %p61 = scmp.ne.s32.totalorder %s49, %s50
    %p62 = scmp.eq.s32.totalorder %s19, 3
    %p63 = por %p61, %p62
    %p65 = scmp.ne.s32.totalorder %s50, %s64
    %p66 = scmp.eq.s32.totalorder %s19, 0
    %p67 = por %p65, %p66
    %s69 = sadd.s32 %s68, 1
    %p72 = scmp.eq.s32.totalorder %s13, 3
    %p73 = scmp.ne.s32.totalorder %s68, %s70
    %p74 = scmp.eq.s32.totalorder %s13, 0
    %p75 = por %p73, %p74
    %p76 = scmp.ne.s32.totalorder %s68, %s70
    %p77 = scmp.eq.s32.totalorder %s18, 3
    %p78 = por %p76, %p77
    %p79 = scmp.ne.s32.totalorder %s70, %s71
    %p80 = scmp.eq.s32.totalorder %s18, 0
    %p81 = por %p79, %p80
    %p82 = scmp.ne.s32.totalorder %s70, %s71
    %p83 = scmp.eq.s32.totalorder %s19, 3
    %p84 = por %p82, %p83
    %p86 = scmp.ne.s32.totalorder %s71, %s85
    %p87 = scmp.eq.s32.totalorder %s19, 0
    %p88 = por %p86, %p87
    %s90 = sadd.s32 %s89, 1
    %p93 = scmp.eq.s32.totalorder %s13, 3
    %p94 = scmp.ne.s32.totalorder %s89, %s91
    %p95 = scmp.eq.s32.totalorder %s13, 0
    %p96 = por %p94, %p95
    %p97 = scmp.ne.s32.totalorder %s89, %s91
    %p98 = scmp.eq.s32.totalorder %s18, 3
    %p99 = por %p97, %p98
    %p100 = scmp.ne.s32.totalorder %s91, %s92
    %p101 = scmp.eq.s32.totalorder %s18, 0
    %p102 = por %p100, %p101
    %p103 = scmp.ne.s32.totalorder %s91, %s92
    %p104 = scmp.eq.s32.totalorder %s19, 3
    %p105 = por %p103, %p104
    %p107 = scmp.ne.s32.totalorder %s92, %s106
    %p108 = scmp.eq.s32.totalorder %s19, 0
    %p109 = por %p107, %p108
    %s111 = sadd.s32 %s110, 1
    %p114 = scmp.eq.s32.totalorder %s13, 3
    %p115 = scmp.ne.s32.totalorder %s110, %s112
    %p116 = scmp.eq.s32.totalorder %s13, 0
    %p117 = por %p115, %p116
    %p118 = scmp.ne.s32.totalorder %s110, %s112
    %p119 = scmp.eq.s32.totalorder %s18, 3
    %p120 = por %p118, %p119
    %p121 = scmp.ne.s32.totalorder %s112, %s113
    %p122 = scmp.eq.s32.totalorder %s18, 0
    %p123 = por %p121, %p122
    %p124 = scmp.ne.s32.totalorder %s112, %s113
    %p125 = scmp.eq.s32.totalorder %s19, 3
    %p126 = por %p124, %p125
    %p128 = scmp.ne.s32.totalorder %s113, %s127
    %p129 = scmp.eq.s32.totalorder %s19, 0
    %p130 = por %p128, %p129
    %s132 = sadd.s32 %s131, 1
    %p135 = scmp.eq.s32.totalorder %s13, 3
    %p136 = scmp.ne.s32.totalorder %s131, %s133
    %p137 = scmp.eq.s32.totalorder %s13, 0
    %p138 = por %p136, %p137
    %p139 = scmp.ne.s32.totalorder %s131, %s133
    %p140 = scmp.eq.s32.totalorder %s18, 3
    %p141 = por %p139, %p140
    %p142 = scmp.ne.s32.totalorder %s133, %s134
    %p143 = scmp.eq.s32.totalorder %s18, 0
    %p144 = por %p142, %p143
    %p145 = scmp.ne.s32.totalorder %s133, %s134
    %p146 = scmp.eq.s32.totalorder %s19, 3
    %p147 = por %p145, %p146
    %p149 = scmp.ne.s32.totalorder %s134, %s148
    %p150 = scmp.eq.s32.totalorder %s19, 0
    %p151 = por %p149, %p150
    %s153 = sadd.s32 %s152, 1
    %p156 = scmp.eq.s32.totalorder %s13, 3
    %p157 = scmp.ne.s32.totalorder %s152, %s154
    %p158 = scmp.eq.s32.totalorder %s13, 0
    %p159 = por %p157, %p158
    %p160 = scmp.ne.s32.totalorder %s152, %s154
    %p161 = scmp.eq.s32.totalorder %s18, 3
    %p162 = por %p160, %p161
    %p163 = scmp.ne.s32.totalorder %s154, %s155
    %p164 = scmp.eq.s32.totalorder %s18, 0
    %p165 = por %p163, %p164
    %p166 = scmp.ne.s32.totalorder %s154, %s155
    %p167 = scmp.eq.s32.totalorder %s19, 3
    %p168 = por %p166, %p167
    %p170 = scmp.ne.s32.totalorder %s155, %s169
    %p171 = scmp.eq.s32.totalorder %s19, 0
    %p172 = por %p170, %p171
    %s173 = ssub.s32 %s13, %s20
    %p174 = scmp.eq.s32.totalorder %s173, 0
    %s176 = sadd.s32 %s175, 1
    %s177 = scalar_select %p174, %s175, %s176
    %p180 = pneg %p174
    %p181 = scmp.eq.s32.totalorder %s13, 3
    %p182 = por %p180, %p181
    %p183 = scmp.ne.s32.totalorder %s175, %s178
    %p184 = scmp.eq.s32.totalorder %s13, 0
    %p185 = por %p183, %p184
    %p186 = scmp.ne.s32.totalorder %s175, %s178
    %p187 = scmp.eq.s32.totalorder %s18, 3
    %p188 = por %p186, %p187
    %p189 = scmp.ne.s32.totalorder %s178, %s179
    %p190 = scmp.eq.s32.totalorder %s18, 0
    %p191 = por %p189, %p190
    %p192 = scmp.ne.s32.totalorder %s178, %s179
    %p193 = scmp.eq.s32.totalorder %s19, 3
    %p194 = por %p192, %p193
    %p196 = scmp.ne.s32.totalorder %s179, %s195
    %p197 = scmp.eq.s32.totalorder %s19, 0
    %p198 = por %p196, %p197
    %p199 = scmp.le.s32.totalorder 1, %s13
    %p200 = scmp.lt.s32.totalorder %s13, 5
    %p201 = pnand %p199, %p200
    %p202 = pneg %p201
    // Predicated region
    $region9: #{dqn_forward.1} parent=5 // pred_check
      _
    $region10: #{dqn_forward.1} parent=5 // pred_check_branch
      %204 = sbr.rel (%p201) target = $region12
    $region11: #{dqn_forward.1} parent=5 // pred_region
      %s205 = ssub.s32 %s13, 1
      // Predicated region
      $region13: #{dqn_forward.1} parent=11 // pred_check
        %p206 = pneg %p60
      $region14: #{dqn_forward.1} parent=11 // pred_check_branch
        %208 = sbr.rel (%p206) target = $region16
      $region15: #{dqn_forward.1} parent=11 // pred_region
        _
      $region16: #{dqn_forward.1} parent=11 // pred_fallthru
        _
      // Predicated region
      $region17: #{dqn_forward.1} parent=11 // pred_check
        %p209 = pneg %p81
      $region18: #{dqn_forward.1} parent=11 // pred_check_branch
        %211 = sbr.rel (%p209) target = $region20
      $region19: #{dqn_forward.1} parent=11 // pred_region
        _
      $region20: #{dqn_forward.1} parent=11 // pred_fallthru
        _
      // Predicated region
      $region21: #{dqn_forward.1} parent=11 // pred_check
        %p212 = pneg %p102
      $region22: #{dqn_forward.1} parent=11 // pred_check_branch
        %214 = sbr.rel (%p212) target = $region24
      $region23: #{dqn_forward.1} parent=11 // pred_region
        _
      $region24: #{dqn_forward.1} parent=11 // pred_fallthru
        _
      // Predicated region
      $region25: #{dqn_forward.1} parent=11 // pred_check
        %p215 = pneg %p123
      $region26: #{dqn_forward.1} parent=11 // pred_check_branch
        %217 = sbr.rel (%p215) target = $region28
      $region27: #{dqn_forward.1} parent=11 // pred_region
        _
      $region28: #{dqn_forward.1} parent=11 // pred_fallthru
        _
      // Predicated region
      $region29: #{dqn_forward.1} parent=11 // pred_check
        %p218 = pneg %p144
      $region30: #{dqn_forward.1} parent=11 // pred_check_branch
        %220 = sbr.rel (%p218) target = $region32
      $region31: #{dqn_forward.1} parent=11 // pred_region
        _
      $region32: #{dqn_forward.1} parent=11 // pred_fallthru
        _
      // Predicated region
      $region33: #{dqn_forward.1} parent=11 // pred_check
        %p221 = pneg %p165
      $region34: #{dqn_forward.1} parent=11 // pred_check_branch
        %223 = sbr.rel (%p221) target = $region36
      $region35: #{dqn_forward.1} parent=11 // pred_region
        _
      $region36: #{dqn_forward.1} parent=11 // pred_fallthru
        _
    $region12: #{dqn_forward.1} parent=5 // pred_fallthru
      _
    %p224 = scmp.lt.s32.totalorder %s13, 4
    // Predicated region
    $region37: #{dqn_forward.1} parent=5 // pred_check
      %p225 = pneg %p224
    $region38: #{dqn_forward.1} parent=5 // pred_check_branch
      %227 = sbr.rel (%p225) target = $region40
    $region39: #{dqn_forward.1} parent=5 // pred_region
      // Predicated region
      $region41: #{dqn_forward.1} parent=39 // pred_check
        %p228 = pneg %p33
      $region42: #{dqn_forward.1} parent=39 // pred_check_branch
        %230 = sbr.rel (%p228) target = $region44
      $region43: #{dqn_forward.1} parent=39 // pred_region
        %s231 = smul.u32 32, %s13
        %p232 = scmp.lt.s32.totalorder %s231, 127
        %s233 = scalar_select %p232, %s231, 127
        %s234 = smul.addr %s233, 4
        %s235 = scalar_lea.vmem %s0, %s234
        %s236 = smul.u32 32, %s13
      $region44: #{dqn_forward.1} parent=39 // pred_fallthru
        _
    $region40: #{dqn_forward.1} parent=5 // pred_fallthru
      _
    %p237 = scmp.le.s32.totalorder 1, %s13
    %p238 = scmp.lt.s32.totalorder %s13, 5
    %p239 = pnand %p237, %p238
    %p240 = pneg %p239
    // Predicated region
    $region45: #{dqn_forward.1} parent=5 // pred_check
      _
    $region46: #{dqn_forward.1} parent=5 // pred_check_branch
      %242 = sbr.rel (%p239) target = $region48
    $region47: #{dqn_forward.1} parent=5 // pred_region
      %s243 = ssub.s32 %s13, 1
      %s244 = smul.u32 32, %s18
      %p245 = scmp.lt.s32.totalorder %s244, 127
      %s246 = scalar_select %p245, %s244, 127
      %s247 = smul.addr %s246, 4
      %s248 = scalar_lea.vmem %s0, %s247
      %p249 = pneg %p39
      %p250 = pneg %p36
      %p251 = pneg %p60
      %p252 = pneg %p57
      %p253 = pneg %p81
      %p254 = pneg %p78
      %p255 = pneg %p102
      %p256 = pneg %p99
      %p257 = pneg %p123
      %p258 = pneg %p120
      %p259 = pneg %p144
      %p260 = pneg %p141
      %p261 = pneg %p165
      %p262 = pneg %p162
      %p263 = pneg %p191
      %p264 = pneg %p188
      %s265 = smul.u32 32, %s18
      %p266 = scmp.lt.s32.totalorder %s265, 127
      %s267 = scalar_select %p266, %s265, 127
      %s268 = smul.addr %s267, 8
      %s269 = scalar_lea.vmem %s7, %s268
      %s270 = smul.u32 32, %s18
      %p271 = scmp.lt.s32.totalorder %s270, 127
      %s272 = scalar_select %p271, %s270, 127
      %s273 = smul.addr %s272, 4
      %s274 = scalar_lea.vmem %s0, %s273
      %s275 = smul.u32 32, %s18
      %s276 = smul.u32 32, %s18
      %p277 = scmp.lt.s32.totalorder %s276, 127
      %s278 = scalar_select %p277, %s276, 127
      %s279 = smul.addr %s278, 8
      %s280 = scalar_lea.vmem %s7, %s279
      %s281 = smul.u32 32, %s18
      %v283 = vld [vmem:[%s274] sm:$0xf]
      %v284 = vld [vmem:[%s274 + $0x4] sm:$0xf]
      %v285 = vld [vmem:[%s274 + $0x8] sm:$0xf]
      %v286 = vld [vmem:[%s274 + $0xc] sm:$0xf]
      %v287 = vld [vmem:[%s274 + $0x10] sm:$0xf]
      %v288 = vld [vmem:[%s274 + $0x14] sm:$0xf]
      %v289 = vld [vmem:[%s274 + $0x18] sm:$0xf]
      %v290 = vld [vmem:[%s274 + $0x1c] sm:$0xf]
      %v291 = vld [vmem:[%s274 + $0x20] sm:$0xf]
      %v292 = vld [vmem:[%s274 + $0x24] sm:$0xf]
      %v293 = vld [vmem:[%s274 + $0x28] sm:$0xf]
      %v294 = vld [vmem:[%s274 + $0x2c] sm:$0xf]
      %v295 = vld [vmem:[%s274 + $0x30] sm:$0xf]
      %v296 = vld [vmem:[%s274 + $0x34] sm:$0xf]
      %v297 = vld [vmem:[%s274 + $0x38] sm:$0xf]
      %v298 = vld [vmem:[%s274 + $0x3c] sm:$0xf]
      %v299 = vld [vmem:[%s274 + $0x40] sm:$0xf]
      %v300 = vld [vmem:[%s274 + $0x44] sm:$0xf]
      %v301 = vld [vmem:[%s274 + $0x48] sm:$0xf]
      %v302 = vld [vmem:[%s274 + $0x4c] sm:$0xf]
      %v303 = vld [vmem:[%s274 + $0x50] sm:$0xf]
      %v304 = vld [vmem:[%s274 + $0x54] sm:$0xf]
      %v305 = vld [vmem:[%s274 + $0x58] sm:$0xf]
      %v306 = vld [vmem:[%s274 + $0x5c] sm:$0xf]
      %v307 = vld [vmem:[%s274 + $0x60] sm:$0xf]
      %v308 = vld [vmem:[%s274 + $0x64] sm:$0xf]
      %v309 = vld [vmem:[%s274 + $0x68] sm:$0xf]
      %v310 = vld [vmem:[%s274 + $0x6c] sm:$0xf]
      %v311 = vld [vmem:[%s274 + $0x70] sm:$0xf]
      %v312 = vld [vmem:[%s274 + $0x74] sm:$0xf]
      %v313 = vld [vmem:[%s274 + $0x78] sm:$0xf]
      %v314 = vld [vmem:[%s274 + $0x7c] sm:$0xf]
      %v315 = vld [vmem:[%s1] sm:$0xf]
      %v316 = vld [vmem:[%s2] sm:$0x1]
      %v318 = vperm.slane %v316, 0
      %v352 = vunpack.c.l.b16 %v283
      %v353 = vunpack.c.l.b16 %v284
      %v354 = vunpack.c.l.b16 %v285
      %v355 = vunpack.c.l.b16 %v286
      %v356 = vunpack.c.l.b16 %v287
      %v357 = vunpack.c.l.b16 %v288
      %v358 = vunpack.c.l.b16 %v289
      %v359 = vunpack.c.l.b16 %v290
      %v360 = vunpack.c.l.b16 %v291
      %v361 = vunpack.c.l.b16 %v292
      %v362 = vunpack.c.l.b16 %v293
      %v363 = vunpack.c.l.b16 %v294
      %v364 = vunpack.c.l.b16 %v295
      %v365 = vunpack.c.l.b16 %v296
      %v366 = vunpack.c.l.b16 %v297
      %v367 = vunpack.c.l.b16 %v298
      %v368 = vunpack.c.l.b16 %v299
      %v369 = vunpack.c.l.b16 %v300
      %v370 = vunpack.c.l.b16 %v301
      %v371 = vunpack.c.l.b16 %v302
      %v372 = vunpack.c.l.b16 %v303
      %v373 = vunpack.c.l.b16 %v304
      %v374 = vunpack.c.l.b16 %v305
      %v375 = vunpack.c.l.b16 %v306
      %v376 = vunpack.c.l.b16 %v307
      %v377 = vunpack.c.l.b16 %v308
      %v378 = vunpack.c.l.b16 %v309
      %v379 = vunpack.c.l.b16 %v310
      %v380 = vunpack.c.l.b16 %v311
      %v381 = vunpack.c.l.b16 %v312
      %v382 = vunpack.c.l.b16 %v313
      %v383 = vunpack.c.l.b16 %v314
      %v384 = vpack.c.b16 %v353, %v352
      %v385 = vpack.c.b16 %v355, %v354
      %v386 = vpack.c.b16 %v357, %v356
      %v387 = vpack.c.b16 %v359, %v358
      %v388 = vpack.c.b16 %v361, %v360
      %v389 = vpack.c.b16 %v363, %v362
      %v390 = vpack.c.b16 %v365, %v364
      %v391 = vpack.c.b16 %v367, %v366
      %v392 = vpack.c.b16 %v369, %v368
      %v393 = vpack.c.b16 %v371, %v370
      %v394 = vpack.c.b16 %v373, %v372
      %v395 = vpack.c.b16 %v375, %v374
      %v396 = vpack.c.b16 %v377, %v376
      %v397 = vpack.c.b16 %v379, %v378
      %v398 = vpack.c.b16 %v381, %v380
      %v399 = vpack.c.b16 %v383, %v382
      %vm400 = vcmask 64512
      %v402 = vsel %vm400, %v384, 0
      %v405 = vsel %vm400, %v385, 0
      %v408 = vsel %vm400, %v386, 0
      %v411 = vsel %vm400, %v387, 0
      %v414 = vsel %vm400, %v388, 0
      %v417 = vsel %vm400, %v389, 0
      %v420 = vsel %vm400, %v390, 0
      %v423 = vsel %vm400, %v391, 0
      %v426 = vsel %vm400, %v392, 0
      %v429 = vsel %vm400, %v393, 0
      %v432 = vsel %vm400, %v394, 0
      %v435 = vsel %vm400, %v395, 0
      %v438 = vsel %vm400, %v396, 0
      %v441 = vsel %vm400, %v397, 0
      %v444 = vsel %vm400, %v398, 0
      %v447 = vsel %vm400, %v399, 0
      %vm449 = vcmask 1043456
      %v451 = vsel %vm449, %v315, 0
      %453 = vmatpush.bf16.msra.mxu0 0
      %454 = vmatpush.bf16.msra.mxu0 0
      %455 = vmatpush.bf16.msra.mxu0 0
      %456 = vmatpush.bf16.msra.mxu0 0
      %457 = vmatpush.bf16.msra.mxu0 0
      %458 = vmatpush.bf16.msra.mxu0 0
      %459 = vmatpush.bf16.msra.mxu0 0
      %460 = vmatpush.bf16.msra.mxu0 %v451
      %461 = vmatmul.bf16.gmra.mxu0 %v402
      %v462 = vpop.f32.mrf.mxu0
      %v463 = vadd.f32 %v318, %v462
      %v464 = vpop.f32.mrf.mxu0
      %v465 = vadd.f32 %v318, %v464
      %466 = vmatmul.bf16.gmra.mxu0 %v405
      %v467 = vpop.f32.mrf.mxu0
      %v468 = vadd.f32 %v318, %v467
      %v469 = vpop.f32.mrf.mxu0
      %v470 = vadd.f32 %v318, %v469
      %471 = vmatmul.bf16.gmra.mxu0 %v408
      %v472 = vpop.f32.mrf.mxu0
      %v473 = vadd.f32 %v318, %v472
      %v474 = vpop.f32.mrf.mxu0
      %v475 = vadd.f32 %v318, %v474
      %476 = vmatmul.bf16.gmra.mxu0 %v411
      %v477 = vpop.f32.mrf.mxu0
      %v478 = vadd.f32 %v318, %v477
      %v479 = vpop.f32.mrf.mxu0
      %v480 = vadd.f32 %v318, %v479
      %481 = vmatmul.bf16.gmra.mxu0 %v414
      %v482 = vpop.f32.mrf.mxu0
      %v483 = vadd.f32 %v318, %v482
      %v484 = vpop.f32.mrf.mxu0
      %v485 = vadd.f32 %v318, %v484
      %486 = vmatmul.bf16.gmra.mxu0 %v417
      %v487 = vpop.f32.mrf.mxu0
      %v488 = vadd.f32 %v318, %v487
      %v489 = vpop.f32.mrf.mxu0
      %v490 = vadd.f32 %v318, %v489
      %491 = vmatmul.bf16.gmra.mxu0 %v420
      %v492 = vpop.f32.mrf.mxu0
      %v493 = vadd.f32 %v318, %v492
      %v494 = vpop.f32.mrf.mxu0
      %v495 = vadd.f32 %v318, %v494
      %496 = vmatmul.bf16.gmra.mxu0 %v423
      %v497 = vpop.f32.mrf.mxu0
      %v498 = vadd.f32 %v318, %v497
      %v499 = vpop.f32.mrf.mxu0
      %v500 = vadd.f32 %v318, %v499
      %501 = vmatmul.bf16.gmra.mxu0 %v426
      %v502 = vpop.f32.mrf.mxu0
      %v503 = vadd.f32 %v318, %v502
      %v504 = vpop.f32.mrf.mxu0
      %v505 = vadd.f32 %v318, %v504
      %506 = vmatmul.bf16.gmra.mxu0 %v429
      %v507 = vpop.f32.mrf.mxu0
      %v508 = vadd.f32 %v318, %v507
      %v509 = vpop.f32.mrf.mxu0
      %v510 = vadd.f32 %v318, %v509
      %511 = vmatmul.bf16.gmra.mxu0 %v432
      %v512 = vpop.f32.mrf.mxu0
      %v513 = vadd.f32 %v318, %v512
      %v514 = vpop.f32.mrf.mxu0
      %v515 = vadd.f32 %v318, %v514
      %516 = vmatmul.bf16.gmra.mxu0 %v435
      %v517 = vpop.f32.mrf.mxu0
      %v518 = vadd.f32 %v318, %v517
      %v519 = vpop.f32.mrf.mxu0
      %v520 = vadd.f32 %v318, %v519
      %521 = vmatmul.bf16.gmra.mxu0 %v438
      %v522 = vpop.f32.mrf.mxu0
      %v523 = vadd.f32 %v318, %v522
      %v524 = vpop.f32.mrf.mxu0
      %v525 = vadd.f32 %v318, %v524
      %526 = vmatmul.bf16.gmra.mxu0 %v441
      %v527 = vpop.f32.mrf.mxu0
      %v528 = vadd.f32 %v318, %v527
      %v529 = vpop.f32.mrf.mxu0
      %v530 = vadd.f32 %v318, %v529
      %531 = vmatmul.bf16.gmra.mxu0 %v444
      %v532 = vpop.f32.mrf.mxu0
      %v533 = vadd.f32 %v318, %v532
      %v534 = vpop.f32.mrf.mxu0
      %v535 = vadd.f32 %v318, %v534
      %536 = vmatmul.bf16.gmra.mxu0 %v447
      %v537 = vpop.f32.mrf.mxu0
      %v538 = vadd.f32 %v318, %v537
      %v539 = vpop.f32.mrf.mxu0
      %v540 = vadd.f32 %v318, %v539
      %541 = vdwg.mxu0
      %v542 = vmax.f32 %v463, 0.0
      %v543 = vmax.f32 %v465, 0.0
      %v544 = vmax.f32 %v468, 0.0
      %v545 = vmax.f32 %v470, 0.0
      %v546 = vmax.f32 %v473, 0.0
      %v547 = vmax.f32 %v475, 0.0
      %v548 = vmax.f32 %v478, 0.0
      %v549 = vmax.f32 %v480, 0.0
      %v550 = vmax.f32 %v483, 0.0
      %v551 = vmax.f32 %v485, 0.0
      %v552 = vmax.f32 %v488, 0.0
      %v553 = vmax.f32 %v490, 0.0
      %v554 = vmax.f32 %v493, 0.0
      %v555 = vmax.f32 %v495, 0.0
      %v556 = vmax.f32 %v498, 0.0
      %v557 = vmax.f32 %v500, 0.0
      %v558 = vmax.f32 %v503, 0.0
      %v559 = vmax.f32 %v505, 0.0
      %v560 = vmax.f32 %v508, 0.0
      %v561 = vmax.f32 %v510, 0.0
      %v562 = vmax.f32 %v513, 0.0
      %v563 = vmax.f32 %v515, 0.0
      %v564 = vmax.f32 %v518, 0.0
      %v565 = vmax.f32 %v520, 0.0
      %v566 = vmax.f32 %v523, 0.0
      %v567 = vmax.f32 %v525, 0.0
      %v568 = vmax.f32 %v528, 0.0
      %v569 = vmax.f32 %v530, 0.0
      %v570 = vmax.f32 %v533, 0.0
      %v571 = vmax.f32 %v535, 0.0
      %v572 = vmax.f32 %v538, 0.0
      %v573 = vmax.f32 %v540, 0.0
      %v574 = vpack.c.bf16 %v543, %v542
      %v575 = vpack.c.bf16 %v545, %v544
      %v576 = vpack.c.bf16 %v547, %v546
      %v577 = vpack.c.bf16 %v549, %v548
      %v578 = vpack.c.bf16 %v551, %v550
      %v579 = vpack.c.bf16 %v553, %v552
      %v580 = vpack.c.bf16 %v555, %v554
      %v581 = vpack.c.bf16 %v557, %v556
      %v582 = vpack.c.bf16 %v559, %v558
      %v583 = vpack.c.bf16 %v561, %v560
      %v584 = vpack.c.bf16 %v563, %v562
      %v585 = vpack.c.bf16 %v565, %v564
      %v586 = vpack.c.bf16 %v567, %v566
      %v587 = vpack.c.bf16 %v569, %v568
      %v588 = vpack.c.bf16 %v571, %v570
      %v589 = vpack.c.bf16 %v573, %v572
      %v590 = vld [vmem:[%s3] sm:$0xf]
      %v591 = vld [vmem:[%s3 + $0x4] sm:$0xf]
      %v592 = vld [vmem:[%s3 + $0x8] sm:$0xf]
      %v593 = vld [vmem:[%s3 + $0xc] sm:$0xf]
      %v594 = vld [vmem:[%s4] sm:$0x1]
      %v596 = vperm.slane %v594, 0
      %v602 = vunpack.c.l.b16 %v590
      %v603 = vunpack.c.l.b16 %v591
      %v604 = vunpack.c.l.b16 %v592
      %v605 = vunpack.c.l.b16 %v593
      %v606 = vpack.c.b16 %v603, %v602
      %v607 = vpack.c.b16 %v605, %v604
      %vm610 = vcmask 261120
      %v612 = vsel %vm610, %v574, 0
      %v615 = vsel %vm610, %v575, 0
      %v618 = vsel %vm610, %v576, 0
      %v621 = vsel %vm610, %v577, 0
      %v624 = vsel %vm610, %v578, 0
      %v627 = vsel %vm610, %v579, 0
      %v630 = vsel %vm610, %v580, 0
      %v633 = vsel %vm610, %v581, 0
      %v636 = vsel %vm610, %v582, 0
      %v639 = vsel %vm610, %v583, 0
      %v642 = vsel %vm610, %v584, 0
      %v645 = vsel %vm610, %v585, 0
      %v648 = vsel %vm610, %v586, 0
      %v651 = vsel %vm610, %v587, 0
      %v654 = vsel %vm610, %v588, 0
      %v657 = vsel %vm610, %v589, 0
      %659 = vmatpush.bf16.msra.mxu0 0
      %660 = vmatpush.bf16.msra.mxu0 0
      %661 = vmatpush.bf16.msra.mxu0 0
      %662 = vmatpush.bf16.msra.mxu0 0
      %663 = vmatpush.bf16.msra.mxu0 0
      %664 = vmatpush.bf16.msra.mxu0 0
      %665 = vmatpush.bf16.msra.mxu0 %v607
      %666 = vmatpush.bf16.msra.mxu0 %v606
      %667 = vmatmul.bf16.gmra.mxu0 %v612
      %v668 = vpop.f32.mrf.mxu0
      %v669 = vadd.f32 %v596, %v668
      %v670 = vpop.f32.mrf.mxu0
      %v671 = vadd.f32 %v596, %v670
      %672 = vmatmul.bf16.gmra.mxu0 %v615
      %v673 = vpop.f32.mrf.mxu0
      %v674 = vadd.f32 %v596, %v673
      %v675 = vpop.f32.mrf.mxu0
      %v676 = vadd.f32 %v596, %v675
      %677 = vmatmul.bf16.gmra.mxu0 %v618
      %v678 = vpop.f32.mrf.mxu0
      %v679 = vadd.f32 %v596, %v678
      %v680 = vpop.f32.mrf.mxu0
      %v681 = vadd.f32 %v596, %v680
      %682 = vmatmul.bf16.gmra.mxu0 %v621
      %v683 = vpop.f32.mrf.mxu0
      %v684 = vadd.f32 %v596, %v683
      %v685 = vpop.f32.mrf.mxu0
      %v686 = vadd.f32 %v596, %v685
      %687 = vmatmul.bf16.gmra.mxu0 %v624
      %v688 = vpop.f32.mrf.mxu0
      %v689 = vadd.f32 %v596, %v688
      %v690 = vpop.f32.mrf.mxu0
      %v691 = vadd.f32 %v596, %v690
      %692 = vmatmul.bf16.gmra.mxu0 %v627
      %v693 = vpop.f32.mrf.mxu0
      %v694 = vadd.f32 %v596, %v693
      %v695 = vpop.f32.mrf.mxu0
      %v696 = vadd.f32 %v596, %v695
      %697 = vmatmul.bf16.gmra.mxu0 %v630
      %v698 = vpop.f32.mrf.mxu0
      %v699 = vadd.f32 %v596, %v698
      %v700 = vpop.f32.mrf.mxu0
      %v701 = vadd.f32 %v596, %v700
      %702 = vmatmul.bf16.gmra.mxu0 %v633
      %v703 = vpop.f32.mrf.mxu0
      %v704 = vadd.f32 %v596, %v703
      %v705 = vpop.f32.mrf.mxu0
      %v706 = vadd.f32 %v596, %v705
      %707 = vmatmul.bf16.gmra.mxu0 %v636
      %v708 = vpop.f32.mrf.mxu0
      %v709 = vadd.f32 %v596, %v708
      %v710 = vpop.f32.mrf.mxu0
      %v711 = vadd.f32 %v596, %v710
      %712 = vmatmul.bf16.gmra.mxu0 %v639
      %v713 = vpop.f32.mrf.mxu0
      %v714 = vadd.f32 %v596, %v713
      %v715 = vpop.f32.mrf.mxu0
      %v716 = vadd.f32 %v596, %v715
      %717 = vmatmul.bf16.gmra.mxu0 %v642
      %v718 = vpop.f32.mrf.mxu0
      %v719 = vadd.f32 %v596, %v718
      %v720 = vpop.f32.mrf.mxu0
      %v721 = vadd.f32 %v596, %v720
      %722 = vmatmul.bf16.gmra.mxu0 %v645
      %v723 = vpop.f32.mrf.mxu0
      %v724 = vadd.f32 %v596, %v723
      %v725 = vpop.f32.mrf.mxu0
      %v726 = vadd.f32 %v596, %v725
      %727 = vmatmul.bf16.gmra.mxu0 %v648
      %v728 = vpop.f32.mrf.mxu0
      %v729 = vadd.f32 %v596, %v728
      %v730 = vpop.f32.mrf.mxu0
      %v731 = vadd.f32 %v596, %v730
      %732 = vmatmul.bf16.gmra.mxu0 %v651
      %v733 = vpop.f32.mrf.mxu0
      %v734 = vadd.f32 %v596, %v733
      %v735 = vpop.f32.mrf.mxu0
      %v736 = vadd.f32 %v596, %v735
      %737 = vmatmul.bf16.gmra.mxu0 %v654
      %v738 = vpop.f32.mrf.mxu0
      %v739 = vadd.f32 %v596, %v738
      %v740 = vpop.f32.mrf.mxu0
      %v741 = vadd.f32 %v596, %v740
      %742 = vmatmul.bf16.gmra.mxu0 %v657
      %v743 = vpop.f32.mrf.mxu0
      %v744 = vadd.f32 %v596, %v743
      %v745 = vpop.f32.mrf.mxu0
      %v746 = vadd.f32 %v596, %v745
      %747 = vdwg.mxu0
      %v748 = vmax.f32 %v669, 0.0
      %v749 = vmax.f32 %v671, 0.0
      %v750 = vmax.f32 %v674, 0.0
      %v751 = vmax.f32 %v676, 0.0
      %v752 = vmax.f32 %v679, 0.0
      %v753 = vmax.f32 %v681, 0.0
      %v754 = vmax.f32 %v684, 0.0
      %v755 = vmax.f32 %v686, 0.0
      %v756 = vmax.f32 %v689, 0.0
      %v757 = vmax.f32 %v691, 0.0
      %v758 = vmax.f32 %v694, 0.0
      %v759 = vmax.f32 %v696, 0.0
      %v760 = vmax.f32 %v699, 0.0
      %v761 = vmax.f32 %v701, 0.0
      %v762 = vmax.f32 %v704, 0.0
      %v763 = vmax.f32 %v706, 0.0
      %v764 = vmax.f32 %v709, 0.0
      %v765 = vmax.f32 %v711, 0.0
      %v766 = vmax.f32 %v714, 0.0
      %v767 = vmax.f32 %v716, 0.0
      %v768 = vmax.f32 %v719, 0.0
      %v769 = vmax.f32 %v721, 0.0
      %v770 = vmax.f32 %v724, 0.0
      %v771 = vmax.f32 %v726, 0.0
      %v772 = vmax.f32 %v729, 0.0
      %v773 = vmax.f32 %v731, 0.0
      %v774 = vmax.f32 %v734, 0.0
      %v775 = vmax.f32 %v736, 0.0
      %v776 = vmax.f32 %v739, 0.0
      %v777 = vmax.f32 %v741, 0.0
      %v778 = vmax.f32 %v744, 0.0
      %v779 = vmax.f32 %v746, 0.0
      %v780 = vpack.c.bf16 %v749, %v748
      %v781 = vpack.c.bf16 %v751, %v750
      %v782 = vpack.c.bf16 %v753, %v752
      %v783 = vpack.c.bf16 %v755, %v754
      %v784 = vpack.c.bf16 %v757, %v756
      %v785 = vpack.c.bf16 %v759, %v758
      %v786 = vpack.c.bf16 %v761, %v760
      %v787 = vpack.c.bf16 %v763, %v762
      %v788 = vpack.c.bf16 %v765, %v764
      %v789 = vpack.c.bf16 %v767, %v766
      %v790 = vpack.c.bf16 %v769, %v768
      %v791 = vpack.c.bf16 %v771, %v770
      %v792 = vpack.c.bf16 %v773, %v772
      %v793 = vpack.c.bf16 %v775, %v774
      %v794 = vpack.c.bf16 %v777, %v776
      %v795 = vpack.c.bf16 %v779, %v778
      %v796 = vld [vmem:[%s5] sm:$0xf]
      %v797 = vld [vmem:[%s5 + $0x4] sm:$0xf]
      %v798 = vld [vmem:[%s5 + $0x8] sm:$0xf]
      %v799 = vld [vmem:[%s5 + $0xc] sm:$0xf]
      %v800 = vld [vmem:[%s6] sm:$0x1]
      %v802 = vperm.slane %v800, 0
      %v808 = vunpack.c.l.b16 %v796
      %v809 = vunpack.c.l.b16 %v797
      %v810 = vunpack.c.l.b16 %v798
      %v811 = vunpack.c.l.b16 %v799
      %v812 = vpack.c.b16 %v809, %v808
      %v813 = vpack.c.b16 %v811, %v810
      %v817 = vsel %vm610, %v780, 0
      %v820 = vsel %vm610, %v781, 0
      %v823 = vsel %vm610, %v782, 0
      %v826 = vsel %vm610, %v783, 0
      %v829 = vsel %vm610, %v784, 0
      %v832 = vsel %vm610, %v785, 0
      %v835 = vsel %vm610, %v786, 0
      %v838 = vsel %vm610, %v787, 0
      %v841 = vsel %vm610, %v788, 0
      %v844 = vsel %vm610, %v789, 0
      %v847 = vsel %vm610, %v790, 0
      %v850 = vsel %vm610, %v791, 0
      %v853 = vsel %vm610, %v792, 0
      %v856 = vsel %vm610, %v793, 0
      %v859 = vsel %vm610, %v794, 0
      %v862 = vsel %vm610, %v795, 0
      %864 = vmatpush.bf16.msra.mxu0 0
      %865 = vmatpush.bf16.msra.mxu0 0
      %866 = vmatpush.bf16.msra.mxu0 0
      %867 = vmatpush.bf16.msra.mxu0 0
      %868 = vmatpush.bf16.msra.mxu0 0
      %869 = vmatpush.bf16.msra.mxu0 0
      %870 = vmatpush.bf16.msra.mxu0 %v813
      %871 = vmatpush.bf16.msra.mxu0 %v812
      %872 = vmatmul.bf16.gmra.mxu0 %v817
      %v873 = vpop.f32.mrf.mxu0
      %v874 = vadd.f32 %v802, %v873
      %v875 = vpop.f32.mrf.mxu0
      %v876 = vadd.f32 %v802, %v875
      %877 = vmatmul.bf16.gmra.mxu0 %v820
      %v878 = vpop.f32.mrf.mxu0
      %v879 = vadd.f32 %v802, %v878
      %v880 = vpop.f32.mrf.mxu0
      %v881 = vadd.f32 %v802, %v880
      %882 = vmatmul.bf16.gmra.mxu0 %v823
      %v883 = vpop.f32.mrf.mxu0
      %v884 = vadd.f32 %v802, %v883
      %v885 = vpop.f32.mrf.mxu0
      %v886 = vadd.f32 %v802, %v885
      %887 = vmatmul.bf16.gmra.mxu0 %v826
      %v888 = vpop.f32.mrf.mxu0
      %v889 = vadd.f32 %v802, %v888
      %v890 = vpop.f32.mrf.mxu0
      %v891 = vadd.f32 %v802, %v890
      %892 = vmatmul.bf16.gmra.mxu0 %v829
      %v893 = vpop.f32.mrf.mxu0
      %v894 = vadd.f32 %v802, %v893
      %v895 = vpop.f32.mrf.mxu0
      %v896 = vadd.f32 %v802, %v895
      %897 = vmatmul.bf16.gmra.mxu0 %v832
      %v898 = vpop.f32.mrf.mxu0
      %v899 = vadd.f32 %v802, %v898
      %v900 = vpop.f32.mrf.mxu0
      %v901 = vadd.f32 %v802, %v900
      %902 = vmatmul.bf16.gmra.mxu0 %v835
      %v903 = vpop.f32.mrf.mxu0
      %v904 = vadd.f32 %v802, %v903
      %v905 = vpop.f32.mrf.mxu0
      %v906 = vadd.f32 %v802, %v905
      %907 = vmatmul.bf16.gmra.mxu0 %v838
      %v908 = vpop.f32.mrf.mxu0
      %v909 = vadd.f32 %v802, %v908
      %v910 = vpop.f32.mrf.mxu0
      %v911 = vadd.f32 %v802, %v910
      %912 = vmatmul.bf16.gmra.mxu0 %v841
      %v913 = vpop.f32.mrf.mxu0
      %v914 = vadd.f32 %v802, %v913
      %v915 = vpop.f32.mrf.mxu0
      %v916 = vadd.f32 %v802, %v915
      %917 = vmatmul.bf16.gmra.mxu0 %v844
      %v918 = vpop.f32.mrf.mxu0
      %v919 = vadd.f32 %v802, %v918
      %v920 = vpop.f32.mrf.mxu0
      %v921 = vadd.f32 %v802, %v920
      %922 = vmatmul.bf16.gmra.mxu0 %v847
      %v923 = vpop.f32.mrf.mxu0
      %v924 = vadd.f32 %v802, %v923
      %v925 = vpop.f32.mrf.mxu0
      %v926 = vadd.f32 %v802, %v925
      %927 = vmatmul.bf16.gmra.mxu0 %v850
      %v928 = vpop.f32.mrf.mxu0
      %v929 = vadd.f32 %v802, %v928
      %v930 = vpop.f32.mrf.mxu0
      %v931 = vadd.f32 %v802, %v930
      %932 = vmatmul.bf16.gmra.mxu0 %v853
      %v933 = vpop.f32.mrf.mxu0
      %v934 = vadd.f32 %v802, %v933
      %v935 = vpop.f32.mrf.mxu0
      %v936 = vadd.f32 %v802, %v935
      %937 = vmatmul.bf16.gmra.mxu0 %v856
      %v938 = vpop.f32.mrf.mxu0
      %v939 = vadd.f32 %v802, %v938
      %v940 = vpop.f32.mrf.mxu0
      %v941 = vadd.f32 %v802, %v940
      %942 = vmatmul.bf16.gmra.mxu0 %v859
      %v943 = vpop.f32.mrf.mxu0
      %v944 = vadd.f32 %v802, %v943
      %v945 = vpop.f32.mrf.mxu0
      %v946 = vadd.f32 %v802, %v945
      %947 = vmatmul.bf16.gmra.mxu0 %v862
      %v948 = vpop.f32.mrf.mxu0
      %v949 = vadd.f32 %v802, %v948
      %v950 = vpop.f32.mrf.mxu0
      %v951 = vadd.f32 %v802, %v950
      %952 = vdwg.mxu0
      %953 = vst [vmem:[%s280] sm:$0xff] %v874
      %954 = vst [vmem:[%s280 + $0x8] sm:$0xff] %v876
      %955 = vst [vmem:[%s280 + $0x10] sm:$0xff] %v879
      %956 = vst [vmem:[%s280 + $0x18] sm:$0xff] %v881
      %957 = vst [vmem:[%s280 + $0x20] sm:$0xff] %v884
      %958 = vst [vmem:[%s280 + $0x28] sm:$0xff] %v886
      %959 = vst [vmem:[%s280 + $0x30] sm:$0xff] %v889
      %960 = vst [vmem:[%s280 + $0x38] sm:$0xff] %v891
      %961 = vst [vmem:[%s280 + $0x40] sm:$0xff] %v894
      %962 = vst [vmem:[%s280 + $0x48] sm:$0xff] %v896
      %963 = vst [vmem:[%s280 + $0x50] sm:$0xff] %v899
      %964 = vst [vmem:[%s280 + $0x58] sm:$0xff] %v901
      %965 = vst [vmem:[%s280 + $0x60] sm:$0xff] %v904
      %966 = vst [vmem:[%s280 + $0x68] sm:$0xff] %v906
      %967 = vst [vmem:[%s280 + $0x70] sm:$0xff] %v909
      %968 = vst [vmem:[%s280 + $0x78] sm:$0xff] %v911
      %969 = vst [vmem:[%s280 + $0x80] sm:$0xff] %v914
      %970 = vst [vmem:[%s280 + $0x88] sm:$0xff] %v916
      %971 = vst [vmem:[%s280 + $0x90] sm:$0xff] %v919
      %972 = vst [vmem:[%s280 + $0x98] sm:$0xff] %v921
      %973 = vst [vmem:[%s280 + $0xa0] sm:$0xff] %v924
      %974 = vst [vmem:[%s280 + $0xa8] sm:$0xff] %v926
      %975 = vst [vmem:[%s280 + $0xb0] sm:$0xff] %v929
      %976 = vst [vmem:[%s280 + $0xb8] sm:$0xff] %v931
      %977 = vst [vmem:[%s280 + $0xc0] sm:$0xff] %v934
      %978 = vst [vmem:[%s280 + $0xc8] sm:$0xff] %v936
      %979 = vst [vmem:[%s280 + $0xd0] sm:$0xff] %v939
      %980 = vst [vmem:[%s280 + $0xd8] sm:$0xff] %v941
      %981 = vst [vmem:[%s280 + $0xe0] sm:$0xff] %v944
      %982 = vst [vmem:[%s280 + $0xe8] sm:$0xff] %v946
      %983 = vst [vmem:[%s280 + $0xf0] sm:$0xff] %v949
      %984 = vst [vmem:[%s280 + $0xf8] sm:$0xff] %v951
      %s985 = smul.u32 32, %s18
      %p986 = scmp.lt.s32.totalorder %s985, 127
      %s987 = scalar_select %p986, %s985, 127
      %s988 = smul.addr %s987, 8
      %s989 = scalar_lea.vmem %s7, %s988
      // Predicated region
      $region49: #{dqn_forward.1} parent=47 // pred_check
        %p990 = pneg %p188
      $region50: #{dqn_forward.1} parent=47 // pred_check_branch
        %992 = sbr.rel (%p990) target = $region52
      $region51: #{dqn_forward.1} parent=47 // pred_region
        %s993 = smul.u32 32, %s18
      $region52: #{dqn_forward.1} parent=47 // pred_fallthru
        _
    $region48: #{dqn_forward.1} parent=5 // pred_fallthru
      _
    %p994 = scmp.le.s32.totalorder 2, %s13
    // Predicated region
    $region53: #{dqn_forward.1} parent=5 // pred_check
      %p995 = pneg %p994
    $region54: #{dqn_forward.1} parent=5 // pred_check_branch
      %997 = sbr.rel (%p995) target = $region56
    $region55: #{dqn_forward.1} parent=5 // pred_region
      %s998 = ssub.s32 %s13, 2
      // Predicated region
      $region57: #{dqn_forward.1} parent=55 // pred_check
        %p999 = pneg %p194
      $region58: #{dqn_forward.1} parent=55 // pred_check_branch
        %1001 = sbr.rel (%p999) target = $region60
      $region59: #{dqn_forward.1} parent=55 // pred_region
        %s1002 = smul.u32 32, %s19
        %p1003 = scmp.lt.s32.totalorder %s1002, 127
        %s1004 = scalar_select %p1003, %s1002, 127
        %s1005 = smul.addr %s1004, 8
        %s1006 = scalar_lea.vmem %s7, %s1005
      $region60: #{dqn_forward.1} parent=55 // pred_fallthru
        _
    $region56: #{dqn_forward.1} parent=5 // pred_fallthru
      _
  $region6: #{dqn_forward.1} parent=0 // loop_footer
    %s17 = sadd.s32 1, %s13
  $region7: #{dqn_forward.1} parent=0 // loop_footer_branch
    %12 = sbr.rel target = $region3
  $region8: #{dqn_forward.1} parent=0 // loop_exit
    _

</llo_original>
